<compile_context>
chip_gen: v7x
topology: tpu7x:2x2x1
jax: 0.10.0
libtpu: 0.0.40
codegen_flags: <defaults>
</compile_context>

<pallas_src>
import functools

import jax
import jax.numpy as jnp
from jax import lax
from jax.experimental import pallas as pl
from jax.experimental.pallas import tpu as pltpu

LANES = 128
SUBLANES = 8


def _lp_loss_kernel(latent_ref, w_ref, b_ref, sel_ref, out_ref, acc_ref, *,
                    batch_tile, steps_per_core, batch, need_row_mask):
    """One batch tile per grid step; lane-dense partial sums in VMEM."""
    core = pl.program_id(0)
    step = pl.program_id(1)

    @pl.when(step == 0)
    def _():
        acc_ref[...] = jnp.zeros_like(acc_ref)

    # relu(latent) in the streamed (native) dtype, upcast only for the MXU.
    x = jnp.maximum(latent_ref[...], 0.0)
    x = x.astype(w_ref.dtype)

    # Fused matmul: col 0 = latent @ c, cols 1..m = latent @ A.T, remaining
    # columns are zero padding.  Lane-dense (TB, L) f32 result.
    z = jnp.dot(x, w_ref[...], preferred_element_type=jnp.float32)

    # Objective column passes through; constraint columns get relu(z - b);
    # zero-padded columns contribute relu(0 - 0) = 0.  One vselect per elem.
    is_obj = sel_ref[...] > 0.5                              # (1, L)
    contrib = jnp.where(is_obj, z, jnp.maximum(z - b_ref[...], 0.0))

    if need_row_mask:
        # Last tile may extend past the true batch; zero the invalid rows.
        tile_idx = core * steps_per_core + step
        row_start = tile_idx * batch_tile
        rows = lax.broadcasted_iota(jnp.int32, contrib.shape, 0) + row_start
        contrib = jnp.where(rows < batch, contrib, 0.0)

    # Hot loop: sublane reduce + VPU add only.  Cross-lane reduction is
    # deferred to the wrapper epilogue.
    acc_ref[...] += jnp.sum(contrib, axis=0, keepdims=True)

    @pl.when(step == pl.num_programs(1) - 1)
    def _():
        out_ref[...] = acc_ref[...].reshape(out_ref.shape)


def prepare_lp_constants(c, A, b, *, lanes=LANES, w_dtype=jnp.float32):
    """One-time (module-init) prep: fused, lane-padded LP constants.

    Returns:
      w_pad : (n, L) columns = [c, A.T, 0-pad]   (w_dtype; bf16 optional for
              large-n compute-bound cases — verify tolerance vs f32 ref)
      b_pad : (1, L) f32, [0, b, 0-pad]
      sel   : (1, L) f32, 1.0 at column 0 (objective), else 0.0
    """
    c = jnp.asarray(c, jnp.float32)
    A = jnp.asarray(A, jnp.float32)
    b = jnp.asarray(b, jnp.float32)
    m, n = A.shape
    ncols = 1 + m
    # TODO(synk): pad L to a multiple of 256 on v6e/v7x when 1+m > 128 (MXU is
    # 256-wide in N there); only matters once the kernel is compute-bound.
    L = max(lanes, pl.cdiv(ncols, lanes) * lanes)

    W = jnp.concatenate([c.reshape(n, 1), A.T], axis=1)          # (n, 1+m)
    w_pad = jnp.zeros((n, L), jnp.float32).at[:, :ncols].set(W).astype(w_dtype)
    b_pad = jnp.zeros((1, L), jnp.float32).at[0, 1:ncols].set(b)
    sel = jnp.zeros((1, L), jnp.float32).at[0, 0].set(1.0)
    return w_pad, b_pad, sel


def _choose_batch_tile(B, n, L, itemsize, budget_bytes):
    """Largest 8-row-aligned tile whose per-step working set fits the budget.

    Per-row bytes ~ double-buffered latent stream + a handful of (row, L) f32
    intermediates (z / constraint / select / mask) — the latter dominate when
    L >> n, which is why the tile is sized on the total working set and not
    just the streamed input.
    """
    if B <= SUBLANES:
        return B
    row_bytes = 2 * n * itemsize + 6 * L * 4
    tile = budget_bytes // max(row_bytes, 1)
    tile = max(SUBLANES, (tile // SUBLANES) * SUBLANES)
    tile = min(tile, 4096)
    tile = min(tile, (B // SUBLANES) * SUBLANES)   # never exceed the batch
    return int(tile)


def lp_loss(predictions, latent, w_pad, b_pad, sel, *, batch_tile=None,
            vmem_budget_bytes=8 << 20):
    """Pallas implementation of LPLoss.forward.

    `predictions` is unused (matches the PyTorch reference).  w_pad/b_pad/sel
    come from prepare_lp_constants() (built once, not per call).  latent is
    streamed in its native dtype (f32 or bf16).
    """
    del predictions  # unused by the reference forward pass
    B, n = latent.shape
    L = w_pad.shape[1]
    itemsize = jnp.dtype(latent.dtype).itemsize

    if batch_tile is None:
        batch_tile = _choose_batch_tile(B, n, L, itemsize, vmem_budget_bytes)
    total_tiles = pl.cdiv(B, batch_tile)
    need_row_mask = (total_tiles * batch_tile != B)

    # v7x megacore: split the batch reduction across both TensorCores when the
    # tile count allows it; on 1-TC chips (v5e/v6e) the axis runs serially.
    ncores = 2 if (total_tiles % 2 == 0) else 1
    steps_per_core = total_tiles // ncores

    kernel = functools.partial(
        _lp_loss_kernel, batch_tile=batch_tile, steps_per_core=steps_per_core,
        batch=B, need_row_mask=need_row_mask)

    partials = pl.pallas_call(
        kernel,
        out_shape=jax.ShapeDtypeStruct((ncores, 1, L), jnp.float32),
        grid=(ncores, steps_per_core),
        in_specs=[
            # latent stream (native dtype)
            pl.BlockSpec((batch_tile, n),
                         lambda i, j: (i * steps_per_core + j, 0)),
            # fused W (resident across the grid)
            pl.BlockSpec((n, L), lambda i, j: (0, 0)),
            # padded b row
            pl.BlockSpec((1, L), lambda i, j: (0, 0)),
            # objective-column selector
            pl.BlockSpec((1, L), lambda i, j: (0, 0)),
        ],
        # Lane-dense per-core partial sums; final reduce happens in XLA below.
        out_specs=pl.BlockSpec((1, 1, L), lambda i, j: (i, 0, 0)),
        scratch_shapes=[pltpu.VMEM((1, L), jnp.float32)],
        compiler_params=pltpu.CompilerParams(
            dimension_semantics=("parallel", "arbitrary"),
            vmem_limit_bytes=48 * 1024 * 1024),
    )(latent, w_pad, b_pad, sel)

    # Tiny epilogue: sum (ncores, 1, L) partials and average over the batch.
    return jnp.sum(partials) * (1.0 / B)


def lp_loss_ref(predictions, latent, c, A, b):
    """Pure-JAX reference mirroring the PyTorch code."""
    del predictions
    latent = jnp.maximum(latent, 0.0)
    lp_obj = latent @ c
    cv = jnp.maximum(latent @ A.T - b, 0.0)
    penalty = jnp.sum(cv, axis=1)
    return jnp.mean(lp_obj + penalty)


if __name__ == "__main__":
    n, m = 32, 16
    key = jax.random.PRNGKey(0)
    k_lat, k_c, k_A, k_b = jax.random.split(key, 4)

    # "LP problem" parameters (module __init__ takes c, A, b).
    c = jax.random.normal(k_c, (n,), dtype=jnp.float32)
    A = jax.random.normal(k_A, (m, n), dtype=jnp.float32)
    b = jax.random.normal(k_b, (m,), dtype=jnp.float32)

    # Hoisted constant prep (module-init time, not per forward call).
    w_pad, b_pad, sel = prepare_lp_constants(c, A, b)

    # (B, batch_tile) cases: single tile; multi-step + 2-way core axis;
    # non-multiple batch exercising the padded-tile row mask.
    cases = [(8, None), (64, 16), (10, None)]
    for B, bt in cases:
        k_lat, k_p, k_x = jax.random.split(k_lat, 3)
        predictions = jax.random.normal(k_p, (B, 1), dtype=jnp.float32)  # API parity (unused)
        latent = jax.random.normal(k_x, (B, n), dtype=jnp.float32)

        loss = lp_loss(predictions, latent, w_pad, b_pad, sel, batch_tile=bt)
        jax.block_until_ready(loss)

        ref = lp_loss_ref(predictions, latent, c, A, b)
        assert jnp.allclose(loss, ref, rtol=1e-4, atol=1e-4), (B, bt, loss, ref)

    print("KERNEL_OK")
</pallas_src>

<mosaic_0001>
module attributes {stable_mosaic.version = 11 : i64} {
  func.func @_lp_loss_kernel(%arg0: i32, %arg1: i32, %arg2: memref<8x32xf32, #tpu.memory_space<vmem>>, %arg3: memref<32x128xf32, #tpu.memory_space<vmem>>, %arg4: memref<1x128xf32, #tpu.memory_space<vmem>>, %arg5: memref<1x128xf32, #tpu.memory_space<vmem>>, %arg6: memref<1x1x128xf32, #tpu.memory_space<vmem>>, %arg7: memref<1x128xf32, #tpu.memory_space<vmem>>) attributes {dimension_semantics = [#tpu.dimension_semantics<parallel>, #tpu.dimension_semantics<arbitrary>], iteration_bounds = array<i64: 1, 1>, scalar_prefetch = 0 : i64, scratch_operands = 1 : i64, tpu.core_type = #tpu.core_type<tc>, window_params = [{transform_indices = @transform_0, window_bounds = array<i64: 8, 32>}, {pipeline_mode = #tpu.pipeline_mode<synchronous>, transform_indices = @transform_1, window_bounds = array<i64: 32, 128>}, {pipeline_mode = #tpu.pipeline_mode<synchronous>, transform_indices = @transform_2, window_bounds = array<i64: 1, 128>}, {pipeline_mode = #tpu.pipeline_mode<synchronous>, transform_indices = @transform_3, window_bounds = array<i64: 1, 128>}, {transform_indices = @transform_4, window_bounds = array<i64: 1, 1, 128>}]} {
    %c0_i32 = arith.constant 0 : i32
    %0 = arith.cmpi eq, %arg1, %c0_i32 : i32
    %1 = arith.extui %0 : i1 to i32
    %c0_i32_0 = arith.constant 0 : i32
    %2 = arith.cmpi ne, %1, %c0_i32_0 : i32
    scf.if %2 {
      %cst_18 = arith.constant 0.000000e+00 : f32
      %27 = vector.broadcast %cst_18 : f32 to vector<1x128xf32>
      %c0_19 = arith.constant 0 : index
      %c0_20 = arith.constant 0 : index
      %28 = vector.load %arg7[%c0_19, %c0_20] : memref<1x128xf32, #tpu.memory_space<vmem>>, vector<1x128xf32>
      tpu.vector_store %arg7[%c0_19, %c0_20], %27 {strides = array<i32>} : memref<1x128xf32, #tpu.memory_space<vmem>>, vector<1x128xf32>,
    } else {
    }
    %c0 = arith.constant 0 : index
    %c0_1 = arith.constant 0 : index
    %3 = vector.load %arg2[%c0, %c0_1] : memref<8x32xf32, #tpu.memory_space<vmem>>, vector<8x32xf32>
    %cst = arith.constant 0.000000e+00 : f32
    %4 = vector.broadcast %cst : f32 to vector<8x32xf32>
    %5 = arith.maximumf %3, %4 : vector<8x32xf32>
    %c0_2 = arith.constant 0 : index
    %c0_3 = arith.constant 0 : index
    %6 = vector.load %arg3[%c0_2, %c0_3] : memref<32x128xf32, #tpu.memory_space<vmem>>, vector<32x128xf32>
    %cst_4 = arith.constant dense<0.000000e+00> : vector<8x128xf32>
    %7 = tpu.matmul %5, %6, %cst_4 {dimension_numbers = #tpu.dot_dimension_numbers<[1], [0], [0], [1], [0, 0, 1, 1], [], []>} : vector<8x32xf32>, vector<32x128xf32>, vector<8x128xf32> -> vector<8x128xf32>
    %c0_5 = arith.constant 0 : index
    %c0_6 = arith.constant 0 : index
    %8 = vector.load %arg5[%c0_5, %c0_6] : memref<1x128xf32, #tpu.memory_space<vmem>>, vector<1x128xf32>
    %cst_7 = arith.constant 5.000000e-01 : f32
    %9 = vector.broadcast %cst_7 : f32 to vector<1x128xf32>
    %10 = arith.cmpf ogt, %8, %9 : vector<1x128xf32>
    %c0_8 = arith.constant 0 : index
    %c0_9 = arith.constant 0 : index
    %11 = vector.load %arg4[%c0_8, %c0_9] : memref<1x128xf32, #tpu.memory_space<vmem>>, vector<1x128xf32>
    %12 = vector.broadcast %11 : vector<1x128xf32> to vector<8x128xf32>
    %13 = arith.subf %7, %12 : vector<8x128xf32>
    %cst_10 = arith.constant 0.000000e+00 : f32
    %14 = vector.broadcast %cst_10 : f32 to vector<8x128xf32>
    %15 = arith.maximumf %13, %14 : vector<8x128xf32>
    %16 = vector.shape_cast %10 : vector<1x128xi1> to vector<1x128xi1>
    %17 = vector.broadcast %16 : vector<1x128xi1> to vector<8x128xi1>
    %18 = arith.select %17, %7, %15 : vector<8x128xi1>, vector<8x128xf32>
    %c0_11 = arith.constant 0 : index
    %c0_12 = arith.constant 0 : index
    %19 = vector.load %arg7[%c0_11, %c0_12] : memref<1x128xf32, #tpu.memory_space<vmem>>, vector<1x128xf32>
    %cst_13 = arith.constant dense<0.000000e+00> : vector<128xf32>
    %20 = vector.multi_reduction <add>, %18, %cst_13 [0] : vector<8x128xf32> to vector<128xf32>
    %21 = vector.shape_cast %20 : vector<128xf32> to vector<1x128xf32>
    %22 = arith.addf %19, %21 : vector<1x128xf32>
    %c0_14 = arith.constant 0 : index
    %c0_15 = arith.constant 0 : index
    %23 = vector.load %arg7[%c0_14, %c0_15] : memref<1x128xf32, #tpu.memory_space<vmem>>, vector<1x128xf32>
    tpu.vector_store %arg7[%c0_14, %c0_15], %22 {strides = array<i32>} : memref<1x128xf32, #tpu.memory_space<vmem>>, vector<1x128xf32>,
    %c0_i32_16 = arith.constant 0 : i32
    %24 = arith.cmpi eq, %arg1, %c0_i32_16 : i32
    %25 = arith.extui %24 : i1 to i32
    %c0_i32_17 = arith.constant 0 : i32
    %26 = arith.cmpi ne, %25, %c0_i32_17 : i32
    scf.if %26 {
      %c0_18 = arith.constant 0 : index
      %c0_19 = arith.constant 0 : index
      %27 = vector.load %arg7[%c0_18, %c0_19] : memref<1x128xf32, #tpu.memory_space<vmem>>, vector<1x128xf32>
      %28 = vector.shape_cast %27 : vector<1x128xf32> to vector<1x1x128xf32>
      %c0_20 = arith.constant 0 : index
      %c0_21 = arith.constant 0 : index
      %c0_22 = arith.constant 0 : index
      %29 = vector.load %arg6[%c0_20, %c0_21, %c0_22] : memref<1x1x128xf32, #tpu.memory_space<vmem>>, vector<1x1x128xf32>
      tpu.vector_store %arg6[%c0_20, %c0_21, %c0_22], %28 {strides = array<i32>} : memref<1x1x128xf32, #tpu.memory_space<vmem>>, vector<1x1x128xf32>,
    } else {
    }
    return
  }
  func.func @transform_0(%arg0: i32, %arg1: i32) -> (i32, i32) {
    %c1_i32 = arith.constant 1 : i32
    %0 = arith.muli %arg0, %c1_i32 : i32
    %1 = arith.addi %0, %arg1 : i32
    %c0_i32 = arith.constant 0 : i32
    %c0_i32_0 = arith.constant 0 : i32
    return %1, %c0_i32 : i32, i32
  }
  func.func @transform_1(%arg0: i32, %arg1: i32) -> (i32, i32) {
    %c0_i32 = arith.constant 0 : i32
    %c0_i32_0 = arith.constant 0 : i32
    %c0_i32_1 = arith.constant 0 : i32
    return %c0_i32, %c0_i32_0 : i32, i32
  }
  func.func @transform_2(%arg0: i32, %arg1: i32) -> (i32, i32) {
    %c0_i32 = arith.constant 0 : i32
    %c0_i32_0 = arith.constant 0 : i32
    %c0_i32_1 = arith.constant 0 : i32
    return %c0_i32, %c0_i32_0 : i32, i32
  }
  func.func @transform_3(%arg0: i32, %arg1: i32) -> (i32, i32) {
    %c0_i32 = arith.constant 0 : i32
    %c0_i32_0 = arith.constant 0 : i32
    %c0_i32_1 = arith.constant 0 : i32
    return %c0_i32, %c0_i32_0 : i32, i32
  }
  func.func @transform_4(%arg0: i32, %arg1: i32) -> (i32, i32, i32) {
    %c0_i32 = arith.constant 0 : i32
    %c0_i32_0 = arith.constant 0 : i32
    %c0_i32_1 = arith.constant 0 : i32
    return %arg0, %c0_i32, %c0_i32_0 : i32, i32, i32
  }
}

</mosaic_0001>

<llo_original>
// kernel: tpu_custom_call.1
$region0: #{tpu_custom_call.1}
  #allocation0 [shape = 'u32[]', space=smem, size = 0x4, offset = 0x4, fixed_abs, tag = 'smem constant byte address 0x4 - core index']
  #allocation1 [shape = 'u32[144,128]{1,0:T(1,128)}', space=vmem, size = 0x12000, scoped, tag = 'internal scratch']
  #allocation2 [shape = 'f32[1,128]{1,0:T(1,128)}', space=vmem, size = 0x200, scoped, tag = 'scratch operand']
  %s0 = inlined_call_operand.hbm [shape: f32[8,32], index: 0, kind: input, shape index: {}]
  %s1 = inlined_call_operand.hbm [shape: f32[32,128], index: 1, kind: input, shape index: {}]
  %s2 = inlined_call_operand.vmem [shape: f32[1,128], index: 2, kind: input, shape index: {}]
  %s3 = inlined_call_operand.vmem [shape: f32[1,128], index: 3, kind: input, shape index: {}]
  %s4 = inlined_call_operand.hbm [shape: f32[1,1,128], index: 4, kind: output, shape index: {}]
  %s5 = sld [smem:[#allocation0]]
  $region42: #{tpu_custom_call.1} parent=0
    _
  %s7 = ssub.s32 1, %s5
  %s8 = scalar_select 0, %s7, %s5
  $region1: #{tpu_custom_call.1} parent=0
    #allocation3 [shape = 'u8[4096]{0}', space=vmem, size = 0x1000, scoped, tag = 'input window, operand 0, single buffered']
    #allocation4 [shape = 's32[1]{0}', space=sflag, size = 0x4, scoped, tag = 'scoped memory for tpu_custom_call.1']
    #allocation5 [shape = 's32[1]{0}', space=sflag, size = 0x4, scoped, tag = 'scoped memory for tpu_custom_call.1']
    #allocation6 [shape = 'u8[16384]{0}', space=vmem, size = 0x4000, scoped, tag = 'input window, operand 1, single buffered']
    #allocation7 [shape = 's32[1]{0}', space=sflag, size = 0x4, scoped, tag = 'scoped memory for tpu_custom_call.1']
    #allocation8 [shape = 'u8[512]{0}', space=vmem, size = 0x400, scoped, tag = 'output window, operand 0, single buffered']
    %9 = vsyncpa [#allocation4], 0
    %10 = vsyncpa [#allocation7], 0
    %11 = vsyncpa [#allocation5], 0
    // Predicated region
    $region2: #{tpu_custom_call.1} parent=1 // pred_check
      _
    $region3: #{tpu_custom_call.1} parent=1 // pred_check_branch
      %13 = sbr.rel (0) target = $region5
    $region4: #{tpu_custom_call.1} parent=1 // pred_region
      %s14 = sadd.s32 0, 0
      %s16 = ssub.s32 128, 128
      %17 = vsyncadd [#allocation4], %s16
      %s18 = smul.addr %s14, 128
      %s19 = scalar_lea.hbm %s0, %s18
      %s21 = sshll.u32 [#allocation3], 4
      %s22 = int_to_ptr.vmem [resolvable:$true] %s21
      %24 = dma.hbm_to_vmem [thread:$0]  %s19, 128, %s22, [#allocation4]
    $region5: #{tpu_custom_call.1} parent=1 // pred_fallthru
      _
    // Predicated region
    $region6: #{tpu_custom_call.1} parent=1 // pred_check
      _
    $region7: #{tpu_custom_call.1} parent=1 // pred_check_branch
      %26 = sbr.rel (0) target = $region9
    $region8: #{tpu_custom_call.1} parent=1 // pred_region
      %s28 = ssub.s32 512, 512
      %29 = vsyncadd [#allocation7], %s28
      %s30 = sshll.u32 [#allocation6], 4
      %s31 = int_to_ptr.vmem [resolvable:$true] %s30
      %36 = dma.hbm_to_vmem [thread:$0]  %s1, 512, %s31, [#allocation7], 128, 128, 8
    $region9: #{tpu_custom_call.1} parent=1 // pred_fallthru
      _
    // Predicated region
    $region10: #{tpu_custom_call.1} parent=1 // pred_check
      _
    $region11: #{tpu_custom_call.1} parent=1 // pred_check_branch
      %38 = sbr.rel (0) target = $region13
    $region12: #{tpu_custom_call.1} parent=1 // pred_region
      _
    $region13: #{tpu_custom_call.1} parent=1 // pred_fallthru
      _
    // Predicated region
    $region14: #{tpu_custom_call.1} parent=1 // pred_check
      _
    $region15: #{tpu_custom_call.1} parent=1 // pred_check_branch
      %40 = sbr.rel (0) target = $region17
    $region16: #{tpu_custom_call.1} parent=1 // pred_region
      _
    $region17: #{tpu_custom_call.1} parent=1 // pred_fallthru
      _
    // Predicated region
    $region18: #{tpu_custom_call.1} parent=1 // pred_check
      _
    $region19: #{tpu_custom_call.1} parent=1 // pred_check_branch
      %42 = sbr.rel (0) target = $region21
    $region20: #{tpu_custom_call.1} parent=1 // pred_region
      %43 = dma.done [#allocation4], 128
    $region21: #{tpu_custom_call.1} parent=1 // pred_fallthru
      _
    // Predicated region
    $region22: #{tpu_custom_call.1} parent=1 // pred_check
      _
    $region23: #{tpu_custom_call.1} parent=1 // pred_check_branch
      %45 = sbr.rel (0) target = $region25
    $region24: #{tpu_custom_call.1} parent=1 // pred_region
      %46 = dma.done [#allocation7], 512
    $region25: #{tpu_custom_call.1} parent=1 // pred_fallthru
      _
    %s47 = sadd.s32 0, 0
    %p48 = scmp.eq.s32.totalorder 0, 0
    // Predicated region
    $region26: #{tpu_custom_call.1} parent=1 // pred_check
      %p49 = pneg %p48
    $region27: #{tpu_custom_call.1} parent=1 // pred_check_branch
      %51 = sbr.rel (%p49) target = $region29
    $region28: #{tpu_custom_call.1} parent=1 // pred_region
      %52 = vst [vmem:[#allocation2] sm:$0x1] 0.0
    $region29: #{tpu_custom_call.1} parent=1 // pred_fallthru
      _
    %v53 = vld [vmem:[#allocation3] sm:$0xff]
    %v54 = vmax.f32 %v53, 0.0
    %v55 = vld [vmem:[#allocation6] sm:$0xff]
    %v56 = vld [vmem:[#allocation6 + $0x8] sm:$0xff]
    %v57 = vld [vmem:[#allocation6 + $0x10] sm:$0xff]
    %v58 = vld [vmem:[#allocation6 + $0x18] sm:$0xff]
    %vm59 = vcmask 261120
    %v61 = vsel %vm59, %v54, 0
    %63 = vmatprep.subr.mxu0 0.0
    %64 = vmatpush1.msra.mxu0 %v55
    %65 = vmatprep.subr.mxu0 0.0
    %66 = vmatpush1.msra.mxu0 %v56
    %67 = vmatprep.subr.mxu0 0.0
    %68 = vmatpush1.msra.mxu0 %v57
    %69 = vmatprep.subr.mxu0 0.0
    %70 = vmatpush1.msra.mxu0 %v58
    %71 = vmatprep.subr.mxu0 0.0
    %72 = vmatpush1.msra.mxu0 0.0
    %73 = vmatprep.subr.mxu0 0.0
    %74 = vmatpush1.msra.mxu0 0.0
    %75 = vmatprep.subr.mxu0 0.0
    %76 = vmatpush1.msra.mxu0 0.0
    %77 = vmatprep.subr.mxu0 0.0
    %78 = vmatpush1.msra.mxu0 0.0
    %79 = vmatprep.subr.mxu0 0.0
    %80 = vmatpush1.msra.mxu0 0.0
    %81 = vmatprep.subr.mxu0 0.0
    %82 = vmatpush1.msra.mxu0 0.0
    %83 = vmatprep.subr.mxu0 0.0
    %84 = vmatpush1.msra.mxu0 0.0
    %85 = vmatprep.subr.mxu0 0.0
    %86 = vmatpush1.msra.mxu0 0.0
    %87 = vmatprep.subr.mxu0 0.0
    %88 = vmatpush1.msra.mxu0 0.0
    %89 = vmatprep.subr.mxu0 0.0
    %90 = vmatpush1.msra.mxu0 0.0
    %91 = vmatprep.subr.mxu0 0.0
    %92 = vmatpush1.msra.mxu0 0.0
    %93 = vmatprep.subr.mxu0 0.0
    %94 = vmatpush1.msra.mxu0 0.0
    %95 = vmatprep.subr.mxu0 0.0
    %96 = vmatpush1.msra.mxu0 0.0
    %97 = vmatprep.subr.mxu0 0.0
    %98 = vmatpush1.msra.mxu0 0.0
    %99 = vmatprep.subr.mxu0 0.0
    %100 = vmatpush1.msra.mxu0 0.0
    %101 = vmatprep.subr.mxu0 0.0
    %102 = vmatpush1.msra.mxu0 0.0
    %103 = vmatprep.subr.mxu0 0.0
    %104 = vmatpush1.msra.mxu0 0.0
    %105 = vmatprep.subr.mxu0 0.0
    %106 = vmatpush1.msra.mxu0 0.0
    %107 = vmatprep.subr.mxu0 0.0
    %108 = vmatpush1.msra.mxu0 0.0
    %109 = vmatprep.subr.mxu0 0.0
    %110 = vmatpush1.msra.mxu0 0.0
    %111 = vmatprep.subr.mxu0 0.0
    %112 = vmatpush1.msra.mxu0 0.0
    %113 = vmatprep.subr.mxu0 0.0
    %114 = vmatpush1.msra.mxu0 0.0
    %115 = vmatprep.subr.mxu0 0.0
    %116 = vmatpush1.msra.mxu0 0.0
    %117 = vmatprep.subr.mxu0 0.0
    %118 = vmatpush1.msra.mxu0 0.0
    %119 = vmatprep.subr.mxu0 0.0
    %120 = vmatpush1.msra.mxu0 0.0
    %121 = vmatprep.subr.mxu0 0.0
    %122 = vmatpush1.msra.mxu0 0.0
    %123 = vmatprep.subr.mxu0 0.0
    %124 = vmatpush1.msra.mxu0 0.0
    %125 = vmatprep.subr.mxu0 0.0
    %126 = vmatpush1.msra.mxu0 0.0
    %127 = vmatprep.mubr.f32.mxu0 0.0
    %128 = vmatmul.mubr.f32.gmra.mrb[0].mxu0 %v61
    %v129 = vpop.f32.mrb[0].mxu0
    %v130 = vadd.f32 0.0, %v129
    %v131 = vpop.f32.mrb[0].mxu0
    %132 = vdwg.mxu0
    %v133 = vld [vmem:[%s3] sm:$0x1]
    %vm134 = vcmp.gt.f32.partialorder %v133, 0.5
    %v135 = vld [vmem:[%s2] sm:$0x1]
    %v137 = vlaneseq
    %v138 = vshrl.u32 %v137, 7
    %v139 = vsub.s32 0, %v138
    %v140 = vrot.slane %v135, %v139
    %v142 = vsub.f32 %v130, %v140
    %v143 = vmax.f32 %v142, 0.0
    %v144 = vsel %vm134, 1, 0
    %v145 = vlaneseq
    %v146 = vshrl.u32 %v145, 7
    %v147 = vsub.s32 0, %v146
    %v148 = vrot.slane %v144, %v147
    %vm149 = vcmp.eq.s32.totalorder %v148, 1
    %v150 = vsel %vm149, %v130, %v143
    %v151 = vld [vmem:[#allocation2] sm:$0x1]
    %v152 = vrot.slane %v150, 4
    %v153 = vadd.f32 %v150, %v152
    %v154 = vrot.slane %v153, 2
    %v155 = vadd.f32 %v153, %v154
    %v156 = vrot.slane %v155, 1
    %v157 = vadd.f32 %v155, %v156
    %v158 = vadd.f32 %v151, %v157
    %159 = vst [vmem:[#allocation2] sm:$0x1] %v158
    // Predicated region
    $region30: #{tpu_custom_call.1} parent=1 // pred_check
      %p160 = pneg %p48
    $region31: #{tpu_custom_call.1} parent=1 // pred_check_branch
      %162 = sbr.rel (%p160) target = $region33
    $region32: #{tpu_custom_call.1} parent=1 // pred_region
      %v163 = vld [vmem:[#allocation2] sm:$0x1]
      %164 = vst [vmem:[#allocation8] sm:$0x1] %v163
    $region33: #{tpu_custom_call.1} parent=1 // pred_fallthru
      _
    // Predicated region
    $region34: #{tpu_custom_call.1} parent=1 // pred_check
      _
    $region35: #{tpu_custom_call.1} parent=1 // pred_check_branch
      %166 = sbr.rel (0) target = $region37
    $region36: #{tpu_custom_call.1} parent=1 // pred_region
      %s168 = ssub.s32 16, 16
      %169 = vsyncadd [#allocation5], %s168
      %s171 = sshll.u32 [#allocation8], 4
      %s172 = int_to_ptr.vmem [resolvable:$true] %s171
      %174 = dma.vmem_to_hbm [thread:$0]  %s172, 16, %s4, [#allocation5]
    $region37: #{tpu_custom_call.1} parent=1 // pred_fallthru
      _
    // Predicated region
    $region38: #{tpu_custom_call.1} parent=1 // pred_check
      _
    $region39: #{tpu_custom_call.1} parent=1 // pred_check_branch
      %176 = sbr.rel (0) target = $region41
    $region40: #{tpu_custom_call.1} parent=1 // pred_region
      %177 = dma.done [#allocation5], 16
    $region41: #{tpu_custom_call.1} parent=1 // pred_fallthru
      _
    %178 = vsyncpa [#allocation4], 1
    %179 = vsyncpa [#allocation7], 1
    %180 = vsyncpa [#allocation5], 1

</llo_original>
